<compile_context>
chip_gen: v7x
topology: tpu7x:2x2x1
jax: 0.10.0
libtpu: 0.0.40
codegen_flags: <defaults>
</compile_context>

<pallas_src>
import jax
import jax.numpy as jnp
from jax.experimental import pallas as pl
from jax.experimental.pallas import tpu as pltpu


_VMEM_TILE_BUDGET = 28 * 1024 * 1024   # pipeline buffers (double-buffered out + 2-slot in)
_VMEM_LIMIT_BYTES = 48 * 1024 * 1024   # scoped VMEM limit; safe on v5e/v6e/v7x


def _pick_tile_h(ho, wo, in_isz, out_isz, c_out):
    """Largest row tile that divides Ho, is a multiple of 8, and fits the VMEM budget."""
    def footprint(th):
        out_blk = 2 * c_out * th * wo * out_isz   # Pallas double-buffers the output block
        in_blk = 2 * th * wo * in_isz             # 2-slot manual input scratch
        return out_blk + in_blk

    if ho % 8 != 0:
        # TODO(synk): for huge, non-8-divisible Ho this single full-height tile can
        # exceed the VMEM budget; such shapes are out of scope for this module.
        return ho
    best = 8
    for th in range(8, ho + 1, 8):
        if ho % th == 0 and footprint(th) <= _VMEM_TILE_BUDGET:
            best = th
    return best


def _conv_wide_nchw(x, w_vec, b_vec, *, p, c_out, ho, wo, out_dtype):
    """Wo >= 128: NCHW output, crop fused into a double-buffered manual input DMA."""
    B, H, W = x.shape
    in_isz = jnp.dtype(x.dtype).itemsize
    out_isz = jnp.dtype(out_dtype).itemsize

    tile_h = _pick_tile_h(ho, wo, in_isz, out_isz, c_out)
    n_row_tiles = ho // tile_h
    n_steps = B * n_row_tiles

    def kernel(x_hbm, w_smem, b_smem, o_ref, xbuf, sems):
        step = pl.program_id(0)
        slot = step & 1

        def src(s):
            bi = s // n_row_tiles
            ri = s % n_row_tiles
            # Crop folded into the DMA: strided rows of Wo, starting at (p + ri*tile_h, p).
            return x_hbm.at[bi, pl.ds(p + ri * tile_h, tile_h), pl.ds(p, wo)]

        # Prime slot 0 on the first step.
        @pl.when(step == 0)
        def _():
            pltpu.make_async_copy(src(0), xbuf.at[0], sems.at[0]).start()

        # Prefetch the NEXT step's window into the other slot before waiting (P4).
        @pl.when(step + 1 < n_steps)
        def _():
            nxt = jnp.minimum(step + 1, n_steps - 1)   # clamp: keep indices in range
            pltpu.make_async_copy(src(nxt), xbuf.at[1 - slot], sems.at[1 - slot]).start()

        # Wait for the current step's window (shape-only descriptor for the wait).
        pltpu.make_async_copy(
            x_hbm.at[0, pl.ds(p, tile_h), pl.ds(p, wo)],
            xbuf.at[slot], sems.at[slot]).wait()

        xt = xbuf[slot].astype(jnp.float32)            # (tile_h, Wo), lane = Wo
        for co in range(c_out):                        # 4 VPU broadcast multiply-adds
            o_ref[co, :, :] = (xt * w_smem[co] + b_smem[co]).astype(o_ref.dtype)

    cost = pl.CostEstimate(
        flops=2 * B * c_out * ho * wo,
        transcendentals=0,
        bytes_accessed=B * ho * wo * in_isz + B * c_out * ho * wo * out_isz,
    )

    return pl.pallas_call(
        kernel,
        out_shape=jax.ShapeDtypeStruct((B, c_out, ho, wo), out_dtype),
        grid=(n_steps,),
        in_specs=[
            pl.BlockSpec(memory_space=pl.ANY),                  # full input stays in HBM
            pl.BlockSpec(memory_space=pltpu.MemorySpace.SMEM),  # 4 weight scalars
            pl.BlockSpec(memory_space=pltpu.MemorySpace.SMEM),  # 4 bias scalars
        ],
        out_specs=pl.BlockSpec(
            (None, c_out, tile_h, wo),                          # NCHW directly, lane = Wo
            lambda s: (s // n_row_tiles, 0, s % n_row_tiles, 0)),
        scratch_shapes=[
            pltpu.VMEM((2, tile_h, wo), x.dtype),               # 2-slot cropped-window buffer
            pltpu.SemaphoreType.DMA((2,)),
        ],
        compiler_params=pltpu.CompilerParams(
            dimension_semantics=("arbitrary",),                 # cross-step scratch dependence
            vmem_limit_bytes=_VMEM_LIMIT_BYTES),
        cost_estimate=cost,
    )(x, w_vec, b_vec)


def _conv_flat(x, w_vec, b_vec, *, p, c_out, ho, wo, out_dtype):
    """Wo < 128: lane-dense flattened layout, BlockSpec auto-pipelining (P1)."""
    B, H, W = x.shape
    L = ho * wo
    in_isz = jnp.dtype(x.dtype).itemsize
    out_isz = jnp.dtype(out_dtype).itemsize

    # One small fused XLA slice+reshape pass; buys fully lane-dense loads/stores below.
    x_flat = x[:, p:p + ho, p:p + wo].reshape(B, 1, L)

    def kernel(x_ref, w_smem, b_smem, o_ref):
        xt = x_ref[...].astype(jnp.float32)            # (1, L), lane-dense
        for co in range(c_out):
            o_ref[co:co + 1, :] = (xt * w_smem[co] + b_smem[co]).astype(o_ref.dtype)

    cost = pl.CostEstimate(
        flops=2 * B * c_out * L,
        transcendentals=0,
        bytes_accessed=B * L * in_isz + B * c_out * L * out_isz,
    )

    out_flat = pl.pallas_call(
        kernel,
        out_shape=jax.ShapeDtypeStruct((B, c_out, L), out_dtype),
        grid=(B,),
        in_specs=[
            pl.BlockSpec((None, 1, L), lambda b: (b, 0, 0)),    # auto double-buffered
            pl.BlockSpec(memory_space=pltpu.MemorySpace.SMEM),
            pl.BlockSpec(memory_space=pltpu.MemorySpace.SMEM),
        ],
        out_specs=pl.BlockSpec((None, c_out, L), lambda b: (b, 0, 0)),
        compiler_params=pltpu.CompilerParams(
            dimension_semantics=("parallel",),
            vmem_limit_bytes=_VMEM_LIMIT_BYTES),
        cost_estimate=cost,
    )(x_flat, w_vec, b_vec)
    return out_flat.reshape(B, c_out, ho, wo)           # free: contiguous array


def conv_transpose2d_1x1(x_nchw, weight, bias, *, padding):
    """ConvTranspose2d with 1x1 kernel, stride=1, padding=padding, C_in == 1.

    x_nchw : (B, 1, H, W)
    weight : (1, C_out, 1, 1)   (PyTorch ConvTranspose2d weight layout)
    bias   : (C_out,)
    returns: (B, C_out, H - 2*padding, W - 2*padding)  in NCHW
    """
    B, C_in, H, W = x_nchw.shape
    assert C_in == 1, "kernel specialized for C_in == 1 (as in the source module)"
    C_out = weight.shape[1]
    p = int(padding)
    Ho, Wo = H - 2 * p, W - 2 * p
    assert Ho > 0 and Wo > 0, "output spatial size must be positive"

    x = x_nchw.reshape(B, H, W)                          # C_in == 1: free reshape
    w_vec = weight.reshape(C_out).astype(jnp.float32)    # 4 scalars -> SMEM
    b_vec = bias.reshape(C_out).astype(jnp.float32)      # 4 scalars -> SMEM
    out_dtype = x_nchw.dtype

    in_isz = jnp.dtype(x.dtype).itemsize
    out_isz = jnp.dtype(out_dtype).itemsize
    flat_footprint = Ho * Wo * (2 * in_isz + 2 * C_out * out_isz)

    if Wo < 128 and flat_footprint <= _VMEM_TILE_BUDGET:
        return _conv_flat(x, w_vec, b_vec, p=p, c_out=C_out, ho=Ho, wo=Wo,
                          out_dtype=out_dtype)
    return _conv_wide_nchw(x, w_vec, b_vec, p=p, c_out=C_out, ho=Ho, wo=Wo,
                           out_dtype=out_dtype)


class Model:
    """JAX/Pallas port of the PyTorch Model (ConvTranspose2d(1, 4, 1, stride=1, padding=2))."""

    def __init__(self, key):
        k_w, k_b = jax.random.split(key)
        C_in, C_out, kH, kW = 1, 4, 1, 1
        # Deterministic init mimicking PyTorch's uniform(-1/sqrt(fan_in), 1/sqrt(fan_in)).
        fan_in = C_out * kH * kW
        bound = 1.0 / (fan_in ** 0.5)
        self.weight = jax.random.uniform(
            k_w, (C_in, C_out, kH, kW), jnp.float32, -bound, bound)
        self.bias = jax.random.uniform(k_b, (C_out,), jnp.float32, -bound, bound)
        self.padding = 2

    def __call__(self, x1):
        v1 = conv_transpose2d_1x1(x1, self.weight, self.bias, padding=self.padding)
        # TODO(synk): `v2 = v1 - None` is a TypeError in PyTorch; returning v1.
        return v1


if __name__ == "__main__":
    key = jax.random.PRNGKey(0)
    k_model, k_x1, k_x2 = jax.random.split(key, 3)

    model = Model(k_model)
    p = model.padding

    def reference(x):
        Ho, Wo = x.shape[2] - 2 * p, x.shape[3] - 2 * p
        xc = x[:, :, p:p + Ho, p:p + Wo]
        return xc * model.weight.reshape(1, 4, 1, 1) + model.bias.reshape(1, 4, 1, 1)

    # The original example input (1,1,1,1) yields a negative output size for this
    # ConvTranspose2d config; use small valid spatial sizes consistent with the module.

    # 1) Small-Wo test -> FLAT (lane-dense) path.
    B, C_in, H, W = 2, 1, 16, 16
    x_small = jax.random.normal(k_x1, (B, C_in, H, W), jnp.float32)
    y_small = model(x_small)
    jax.block_until_ready(y_small)
    assert y_small.shape == (B, 4, H - 2 * p, W - 2 * p)
    assert jnp.allclose(y_small, reference(x_small), atol=1e-5, rtol=1e-5)

    # 2) Wide-Wo test -> NCHW path with fused-crop, double-buffered input DMA (2 grid steps).
    B2, H2, W2 = 2, 20, 132          # -> Ho = 16, Wo = 128
    x_wide = jax.random.normal(k_x2, (B2, 1, H2, W2), jnp.float32)
    y_wide = model(x_wide)
    jax.block_until_ready(y_wide)
    assert y_wide.shape == (B2, 4, H2 - 2 * p, W2 - 2 * p)
    assert jnp.allclose(y_wide, reference(x_wide), atol=1e-5, rtol=1e-5)

    print("KERNEL_OK")
</pallas_src>

<mosaic_0001>
module attributes {stable_mosaic.version = 11 : i64} {
  func.func @kernel(%arg0: i32, %arg1: memref<1x1x144xf32, #tpu.memory_space<vmem>>, %arg2: memref<4xf32, #tpu.memory_space<smem>>, %arg3: memref<4xf32, #tpu.memory_space<smem>>, %arg4: memref<1x4x144xf32, #tpu.memory_space<vmem>>) attributes {dimension_semantics = [#tpu.dimension_semantics<parallel>], iteration_bounds = array<i64: 2>, scalar_prefetch = 0 : i64, scratch_operands = 0 : i64, tpu.core_type = #tpu.core_type<tc>, window_params = [{transform_indices = @transform_0, window_bounds = array<i64: 1, 1, 144>}, {transform_indices = @transform_1, window_bounds = array<i64: 4>}, {transform_indices = @transform_2, window_bounds = array<i64: 4>}, {transform_indices = @transform_3, window_bounds = array<i64: 1, 4, 144>}]} {
    %c0 = arith.constant 0 : index
    %c0_0 = arith.constant 0 : index
    %c0_1 = arith.constant 0 : index
    %0 = vector.load %arg1[%c0, %c0_0, %c0_1] : memref<1x1x144xf32, #tpu.memory_space<vmem>>, vector<1x1x144xf32>
    %1 = vector.shape_cast %0 : vector<1x1x144xf32> to vector<1x144xf32>
    %c0_2 = arith.constant 0 : index
    %2 = memref.load %arg2[%c0_2] : memref<4xf32, #tpu.memory_space<smem>>
    %3 = vector.broadcast %2 : f32 to vector<1x144xf32>
    %4 = arith.mulf %1, %3 : vector<1x144xf32>
    %c0_3 = arith.constant 0 : index
    %5 = memref.load %arg3[%c0_3] : memref<4xf32, #tpu.memory_space<smem>>
    %6 = vector.broadcast %5 : f32 to vector<1x144xf32>
    %7 = arith.addf %4, %6 : vector<1x144xf32>
    %c0_4 = arith.constant 0 : index
    %c0_5 = arith.constant 0 : index
    %c0_6 = arith.constant 0 : index
    %8 = vector.load %arg4[%c0_4, %c0_5, %c0_6] : memref<1x4x144xf32, #tpu.memory_space<vmem>>, vector<1x1x144xf32>
    %9 = vector.shape_cast %8 : vector<1x1x144xf32> to vector<1x144xf32>
    %10 = vector.shape_cast %7 : vector<1x144xf32> to vector<1x1x144xf32>
    tpu.vector_store %arg4[%c0_4, %c0_5, %c0_6], %10 {strides = array<i32>} : memref<1x4x144xf32, #tpu.memory_space<vmem>>, vector<1x1x144xf32>,
    %c1 = arith.constant 1 : index
    %11 = memref.load %arg2[%c1] : memref<4xf32, #tpu.memory_space<smem>>
    %12 = vector.broadcast %11 : f32 to vector<1x144xf32>
    %13 = arith.mulf %1, %12 : vector<1x144xf32>
    %c1_7 = arith.constant 1 : index
    %14 = memref.load %arg3[%c1_7] : memref<4xf32, #tpu.memory_space<smem>>
    %15 = vector.broadcast %14 : f32 to vector<1x144xf32>
    %16 = arith.addf %13, %15 : vector<1x144xf32>
    %c0_8 = arith.constant 0 : index
    %c1_9 = arith.constant 1 : index
    %c0_10 = arith.constant 0 : index
    %17 = vector.load %arg4[%c0_8, %c1_9, %c0_10] : memref<1x4x144xf32, #tpu.memory_space<vmem>>, vector<1x1x144xf32>
    %18 = vector.shape_cast %17 : vector<1x1x144xf32> to vector<1x144xf32>
    %19 = vector.shape_cast %16 : vector<1x144xf32> to vector<1x1x144xf32>
    tpu.vector_store %arg4[%c0_8, %c1_9, %c0_10], %19 {strides = array<i32>} : memref<1x4x144xf32, #tpu.memory_space<vmem>>, vector<1x1x144xf32>,
    %c2 = arith.constant 2 : index
    %20 = memref.load %arg2[%c2] : memref<4xf32, #tpu.memory_space<smem>>
    %21 = vector.broadcast %20 : f32 to vector<1x144xf32>
    %22 = arith.mulf %1, %21 : vector<1x144xf32>
    %c2_11 = arith.constant 2 : index
    %23 = memref.load %arg3[%c2_11] : memref<4xf32, #tpu.memory_space<smem>>
    %24 = vector.broadcast %23 : f32 to vector<1x144xf32>
    %25 = arith.addf %22, %24 : vector<1x144xf32>
    %c0_12 = arith.constant 0 : index
    %c2_13 = arith.constant 2 : index
    %c0_14 = arith.constant 0 : index
    %26 = vector.load %arg4[%c0_12, %c2_13, %c0_14] : memref<1x4x144xf32, #tpu.memory_space<vmem>>, vector<1x1x144xf32>
    %27 = vector.shape_cast %26 : vector<1x1x144xf32> to vector<1x144xf32>
    %28 = vector.shape_cast %25 : vector<1x144xf32> to vector<1x1x144xf32>
    tpu.vector_store %arg4[%c0_12, %c2_13, %c0_14], %28 {strides = array<i32>} : memref<1x4x144xf32, #tpu.memory_space<vmem>>, vector<1x1x144xf32>,
    %c3 = arith.constant 3 : index
    %29 = memref.load %arg2[%c3] : memref<4xf32, #tpu.memory_space<smem>>
    %30 = vector.broadcast %29 : f32 to vector<1x144xf32>
    %31 = arith.mulf %1, %30 : vector<1x144xf32>
    %c3_15 = arith.constant 3 : index
    %32 = memref.load %arg3[%c3_15] : memref<4xf32, #tpu.memory_space<smem>>
    %33 = vector.broadcast %32 : f32 to vector<1x144xf32>
    %34 = arith.addf %31, %33 : vector<1x144xf32>
    %c0_16 = arith.constant 0 : index
    %c3_17 = arith.constant 3 : index
    %c0_18 = arith.constant 0 : index
    %35 = vector.load %arg4[%c0_16, %c3_17, %c0_18] : memref<1x4x144xf32, #tpu.memory_space<vmem>>, vector<1x1x144xf32>
    %36 = vector.shape_cast %35 : vector<1x1x144xf32> to vector<1x144xf32>
    %37 = vector.shape_cast %34 : vector<1x144xf32> to vector<1x1x144xf32>
    tpu.vector_store %arg4[%c0_16, %c3_17, %c0_18], %37 {strides = array<i32>} : memref<1x4x144xf32, #tpu.memory_space<vmem>>, vector<1x1x144xf32>,
    return
  }
  func.func @transform_0(%arg0: i32) -> (i32, i32, i32) {
    %c0_i32 = arith.constant 0 : i32
    %c0_i32_0 = arith.constant 0 : i32
    %c0_i32_1 = arith.constant 0 : i32
    return %arg0, %c0_i32, %c0_i32_0 : i32, i32, i32
  }
  func.func @transform_1(%arg0: i32) -> i32 {
    %c0_i32 = arith.constant 0 : i32
    %c0_i32_0 = arith.constant 0 : i32
    return %c0_i32 : i32
  }
  func.func @transform_2(%arg0: i32) -> i32 {
    %c0_i32 = arith.constant 0 : i32
    %c0_i32_0 = arith.constant 0 : i32
    return %c0_i32 : i32
  }
  func.func @transform_3(%arg0: i32) -> (i32, i32, i32) {
    %c0_i32 = arith.constant 0 : i32
    %c0_i32_0 = arith.constant 0 : i32
    %c0_i32_1 = arith.constant 0 : i32
    return %arg0, %c0_i32, %c0_i32_0 : i32, i32, i32
  }
}

</mosaic_0001>

<llo_original>
// kernel: tpu_custom_call.1
$region0: #{tpu_custom_call.1}
  #allocation0 [shape = 'u32[]', space=smem, size = 0x4, offset = 0x4, fixed_abs, tag = 'smem constant byte address 0x4 - core index']
  #allocation1 [shape = 'u32[144,128]{1,0:T(1,128)}', space=vmem, size = 0x12000, scoped, tag = 'internal scratch']
  %s0 = inlined_call_operand.hbm [shape: f32[2,1,144], index: 0, kind: input, shape index: {}]
  %s1 = inlined_call_operand.vmem [shape: f32[4], index: 1, kind: input, shape index: {}]
  %s2 = inlined_call_operand.vmem [shape: f32[4], index: 2, kind: input, shape index: {}]
  %s3 = inlined_call_operand.hbm [shape: f32[2,4,144], index: 3, kind: output, shape index: {}]
  %s4 = sld [smem:[#allocation0]]
  $region57: #{tpu_custom_call.1} parent=0
    _
  %s6 = ssub.s32 1, %s4
  %s7 = scalar_select 0, %s6, %s4
  $region1: #{tpu_custom_call.1} parent=0
    #allocation2 [shape = 'u8[2048]{0}', space=vmem, size = 0x800, scoped, tag = 'input window, operand 0']
    #allocation3 [shape = 's32[2]{0}', space=sflag, size = 0x8, scoped, tag = 'scoped memory for tpu_custom_call.1']
    #allocation4 [shape = 's32[2]{0}', space=sflag, size = 0x8, scoped, tag = 'scoped memory for tpu_custom_call.1']
    #allocation5 [shape = 's32[2]{0}', space=sflag, size = 0x8, scoped, tag = 'scoped memory for tpu_custom_call.1']
    #allocation6 [shape = 'u8[512]{0}', space=smem, size = 0x200, scoped, tag = 'input window, operand 1, single buffered']
    #allocation7 [shape = 'u8[512]{0}', space=smem, size = 0x200, scoped, tag = 'input window, operand 2, single buffered']
    #allocation8 [shape = 's32[1]{0}', space=sflag, size = 0x4, scoped, tag = 'scoped memory for tpu_custom_call.1']
    #allocation9 [shape = 'u8[8192]{0}', space=vmem, size = 0x2000, scoped, tag = 'output window, operand 0']
    %8 = vsyncpa [#allocation3], 0
    %s9 = scalar_lea.sflag [#allocation3], 1
    %10 = vsyncpa %s9, 0
    %11 = vsyncpa [#allocation5], 0
    %12 = vsyncpa [#allocation8], 0
    %13 = vsyncpa [#allocation4], 0
    %s14 = scalar_lea.sflag [#allocation4], 1
    %15 = vsyncpa %s14, 0
    loop: start=0, step=1, limit=4
    $region2: #{tpu_custom_call.1} parent=1 // loop_pre_header
      _
    $region3: #{tpu_custom_call.1} parent=1 // loop_header
      %s17 = sphi 0, %s21
      %p18 = scmp.ge.s32.totalorder %s17, 4
      %s27 = sphi 0, %s29
      %s30 = sphi 0, %s27
      %s31 = sphi 0, %s30
      %s47 = sphi 0, %s31
      %s51 = sphi 0, %s51
      %s53 = sphi 0, %s51
      %s54 = sphi 0, %s53
      %s68 = sphi 0, %s54
      %s72 = sphi 0, %s72
      %s74 = sphi 0, %s72
      %s75 = sphi 0, %s74
      %s89 = sphi 0, %s75
      %s95 = sphi 0, %s97
      %s98 = sphi 0, %s95
      %s99 = sphi 0, %s98
      %s115 = sphi 0, %s99
    $region4: #{tpu_custom_call.1} parent=1 // loop_header_branch
      %20 = sbr.rel (%p18) target = $region8
    $region5: #{tpu_custom_call.1} parent=1 // loop_body
      %s22 = ssub.s32 %s17, 1
      %s23 = ssub.s32 %s17, 2
      %s24 = sadd.s32 %s17, 1
      %s25 = ssub.s32 %s17, %s24
      %p26 = scmp.eq.s32.totalorder %s25, 0
      %s28 = sadd.s32 %s27, 1
      %s29 = scalar_select %p26, %s27, %s28
      %p32 = pneg %p26
      %p33 = scmp.eq.s32.totalorder %s17, 1
      %p34 = por %p32, %p33
      %p35 = scmp.ne.s32.totalorder %s27, %s30
      %p36 = scmp.eq.s32.totalorder %s17, 0
      %p37 = por %p35, %p36
      %p38 = scmp.ne.s32.totalorder %s27, %s30
      %p39 = scmp.eq.s32.totalorder %s22, 1
      %p40 = por %p38, %p39
      %p41 = scmp.ne.s32.totalorder %s30, %s31
      %p42 = scmp.eq.s32.totalorder %s22, 0
      %p43 = por %p41, %p42
      %p44 = scmp.ne.s32.totalorder %s30, %s31
      %p45 = scmp.eq.s32.totalorder %s23, 1
      %p46 = por %p44, %p45
      %p48 = scmp.ne.s32.totalorder %s31, %s47
      %p49 = scmp.eq.s32.totalorder %s23, 0
      %p50 = por %p48, %p49
      %s52 = sadd.s32 %s51, 1
      %p55 = scmp.eq.s32.totalorder %s17, 1
      %p56 = scmp.ne.s32.totalorder %s51, %s53
      %p57 = scmp.eq.s32.totalorder %s17, 0
      %p58 = por %p56, %p57
      %p59 = scmp.ne.s32.totalorder %s51, %s53
      %p60 = scmp.eq.s32.totalorder %s22, 1
      %p61 = por %p59, %p60
      %p62 = scmp.ne.s32.totalorder %s53, %s54
      %p63 = scmp.eq.s32.totalorder %s22, 0
      %p64 = por %p62, %p63
      %p65 = scmp.ne.s32.totalorder %s53, %s54
      %p66 = scmp.eq.s32.totalorder %s23, 1
      %p67 = por %p65, %p66
      %p69 = scmp.ne.s32.totalorder %s54, %s68
      %p70 = scmp.eq.s32.totalorder %s23, 0
      %p71 = por %p69, %p70
      %s73 = sadd.s32 %s72, 1
      %p76 = scmp.eq.s32.totalorder %s17, 1
      %p77 = scmp.ne.s32.totalorder %s72, %s74
      %p78 = scmp.eq.s32.totalorder %s17, 0
      %p79 = por %p77, %p78
      %p80 = scmp.ne.s32.totalorder %s72, %s74
      %p81 = scmp.eq.s32.totalorder %s22, 1
      %p82 = por %p80, %p81
      %p83 = scmp.ne.s32.totalorder %s74, %s75
      %p84 = scmp.eq.s32.totalorder %s22, 0
      %p85 = por %p83, %p84
      %p86 = scmp.ne.s32.totalorder %s74, %s75
      %p87 = scmp.eq.s32.totalorder %s23, 1
      %p88 = por %p86, %p87
      %p90 = scmp.ne.s32.totalorder %s75, %s89
      %p91 = scmp.eq.s32.totalorder %s23, 0
      %p92 = por %p90, %p91
      %s93 = ssub.s32 %s17, %s24
      %p94 = scmp.eq.s32.totalorder %s93, 0
      %s96 = sadd.s32 %s95, 1
      %s97 = scalar_select %p94, %s95, %s96
      %p100 = pneg %p94
      %p101 = scmp.eq.s32.totalorder %s17, 1
      %p102 = por %p100, %p101
      %p103 = scmp.ne.s32.totalorder %s95, %s98
      %p104 = scmp.eq.s32.totalorder %s17, 0
      %p105 = por %p103, %p104
      %p106 = scmp.ne.s32.totalorder %s95, %s98
      %p107 = scmp.eq.s32.totalorder %s22, 1
      %p108 = por %p106, %p107
      %p109 = scmp.ne.s32.totalorder %s98, %s99
      %p110 = scmp.eq.s32.totalorder %s22, 0
      %p111 = por %p109, %p110
      %p112 = scmp.ne.s32.totalorder %s98, %s99
      %p113 = scmp.eq.s32.totalorder %s23, 1
      %p114 = por %p112, %p113
      %p116 = scmp.ne.s32.totalorder %s99, %s115
      %p117 = scmp.eq.s32.totalorder %s23, 0
      %p118 = por %p116, %p117
      %p119 = scmp.le.s32.totalorder 1, %s17
      %p120 = scmp.lt.s32.totalorder %s17, 3
      %p121 = pnand %p119, %p120
      %p122 = pneg %p121
      // Predicated region
      $region9: #{tpu_custom_call.1} parent=5 // pred_check
        _
      $region10: #{tpu_custom_call.1} parent=5 // pred_check_branch
        %124 = sbr.rel (%p121) target = $region12
      $region11: #{tpu_custom_call.1} parent=5 // pred_region
        %s125 = ssub.s32 %s17, 1
        // Predicated region
        $region13: #{tpu_custom_call.1} parent=11 // pred_check
          %p126 = pneg %p64
        $region14: #{tpu_custom_call.1} parent=11 // pred_check_branch
          %128 = sbr.rel (%p126) target = $region16
        $region15: #{tpu_custom_call.1} parent=11 // pred_region
          %s130 = ssub.s32 16, 16
          %131 = vsyncadd [#allocation5], %s130
          %s133 = sshll.u32 %s1, 4
          %s134 = int_to_ptr.vmem [resolvable:$true] %s133
          %136 = dma.vmem_to_smem %s134, 16, [#allocation6], [#allocation5]
        $region16: #{tpu_custom_call.1} parent=11 // pred_fallthru
          _
        // Predicated region
        $region17: #{tpu_custom_call.1} parent=11 // pred_check
          %p137 = pneg %p85
        $region18: #{tpu_custom_call.1} parent=11 // pred_check_branch
          %139 = sbr.rel (%p137) target = $region20
        $region19: #{tpu_custom_call.1} parent=11 // pred_region
          %s141 = ssub.s32 16, 16
          %142 = vsyncadd [#allocation8], %s141
          %s144 = sshll.u32 %s2, 4
          %s145 = int_to_ptr.vmem [resolvable:$true] %s144
          %147 = dma.vmem_to_smem %s145, 16, [#allocation7], [#allocation8]
        $region20: #{tpu_custom_call.1} parent=11 // pred_fallthru
          _
      $region12: #{tpu_custom_call.1} parent=5 // pred_fallthru
        _
      %p148 = scmp.lt.s32.totalorder %s17, 2
      // Predicated region
      $region21: #{tpu_custom_call.1} parent=5 // pred_check
        %p149 = pneg %p148
      $region22: #{tpu_custom_call.1} parent=5 // pred_check_branch
        %151 = sbr.rel (%p149) target = $region24
      $region23: #{tpu_custom_call.1} parent=5 // pred_region
        // Predicated region
        $region25: #{tpu_custom_call.1} parent=23 // pred_check
          %p152 = pneg %p37
        $region26: #{tpu_custom_call.1} parent=23 // pred_check_branch
          %154 = sbr.rel (%p152) target = $region28
        $region27: #{tpu_custom_call.1} parent=23 // pred_region
          %s155 = sand.u32 %s27, 1
          %s156 = scalar_lea.sflag [#allocation3], %s155
          %s157 = sand.u32 %s27, 1
          %s158 = smul.addr %s157, 2
          %s159 = scalar_lea.vmem [#allocation2], %s158
          %s161 = ssub.s32 32, 32
          %162 = vsyncadd %s156, %s161
          %s163 = smul.addr %s17, 2
          %s164 = smul.addr %s163, 16
          %s165 = scalar_lea.hbm %s0, %s164
          %s167 = sshll.u32 %s159, 4
          %s168 = int_to_ptr.vmem [resolvable:$true] %s167
          %170 = dma.hbm_to_vmem [thread:$0]  %s165, 32, %s168, %s156
        $region28: #{tpu_custom_call.1} parent=23 // pred_fallthru
          _
      $region24: #{tpu_custom_call.1} parent=5 // pred_fallthru
        _
      %p171 = scmp.le.s32.totalorder 1, %s17
      %p172 = scmp.lt.s32.totalorder %s17, 3
      %p173 = pnand %p171, %p172
      %p174 = pneg %p173
      // Predicated region
      $region29: #{tpu_custom_call.1} parent=5 // pred_check
        _
      $region30: #{tpu_custom_call.1} parent=5 // pred_check_branch
        %176 = sbr.rel (%p173) target = $region32
      $region31: #{tpu_custom_call.1} parent=5 // pred_region
        %s177 = ssub.s32 %s17, 1
        %s178 = sand.u32 %s30, 1
        %s179 = scalar_lea.sflag [#allocation3], %s178
        %s180 = sand.u32 %s30, 1
        %s181 = smul.addr %s180, 2
        %s182 = scalar_lea.vmem [#allocation2], %s181
        // Predicated region
        $region33: #{tpu_custom_call.1} parent=31 // pred_check
          %p183 = pneg %p43
        $region34: #{tpu_custom_call.1} parent=31 // pred_check_branch
          %185 = sbr.rel (%p183) target = $region36
        $region35: #{tpu_custom_call.1} parent=31 // pred_region
          %186 = dma.done %s179, 32
        $region36: #{tpu_custom_call.1} parent=31 // pred_fallthru
          _
        // Predicated region
        $region37: #{tpu_custom_call.1} parent=31 // pred_check
          %p187 = pneg %p64
        $region38: #{tpu_custom_call.1} parent=31 // pred_check_branch
          %189 = sbr.rel (%p187) target = $region40
        $region39: #{tpu_custom_call.1} parent=31 // pred_region
          %190 = dma.done [#allocation5], 16
        $region40: #{tpu_custom_call.1} parent=31 // pred_fallthru
          _
        // Predicated region
        $region41: #{tpu_custom_call.1} parent=31 // pred_check
          %p191 = pneg %p85
        $region42: #{tpu_custom_call.1} parent=31 // pred_check_branch
          %193 = sbr.rel (%p191) target = $region44
        $region43: #{tpu_custom_call.1} parent=31 // pred_region
          %194 = dma.done [#allocation8], 16
        $region44: #{tpu_custom_call.1} parent=31 // pred_fallthru
          _
        %195 = sfence
        %s196 = sand.u32 %s30, 1
        %s197 = scalar_lea.sflag [#allocation3], %s196
        %s198 = sand.u32 %s30, 1
        %s199 = smul.addr %s198, 2
        %s200 = scalar_lea.vmem [#allocation2], %s199
        %p201 = pneg %p43
        %p202 = pneg %p40
        %p203 = pneg %p64
        %p204 = pneg %p61
        %p205 = pneg %p85
        %p206 = pneg %p82
        %p207 = pneg %p111
        %p208 = pneg %p108
        %s209 = sand.u32 %s98, 1
        %s210 = scalar_lea.sflag [#allocation4], %s209
        %s211 = sand.u32 %s98, 1
        %s212 = smul.addr %s211, 8
        %s213 = scalar_lea.vmem [#allocation9], %s212
        %v214 = vld [vmem:[%s182] sm:$0x3]
        %s215 = sld [smem:[#allocation6]]
        %v216 = vstv %s215
        %v217 = vmul.f32 %v214, %v216
        %s218 = sld [smem:[#allocation7]]
        %v219 = vstv %s218
        %v220 = vadd.f32 %v217, %v219
        %v221 = vlaneseq
        %vm222 = vcmp.ge.s32.totalorder %v221, 0
        %vm223 = vcmp.lt.s32.totalorder %v221, 144
        %vm224 = vmand %vm222, %vm223
        %225 = vst.msk [vmem:[%s213] ss:$4 sm:$0x3] %vm224, %v220
        %s226 = sld [smem:[#allocation6 + $0x1]]
        %v227 = vstv %s226
        %v228 = vmul.f32 %v214, %v227
        %s229 = sld [smem:[#allocation7 + $0x1]]
        %v230 = vstv %s229
        %v231 = vadd.f32 %v228, %v230
        %s232 = scalar_lea.vmem %s213, 1 [#allocation9]
        %233 = vst.msk [vmem:[%s232] ss:$4 sm:$0x3] %vm224, %v231
        %s234 = sld [smem:[#allocation6 + $0x2]]
        %v235 = vstv %s234
        %v236 = vmul.f32 %v214, %v235
        %s237 = sld [smem:[#allocation7 + $0x2]]
        %v238 = vstv %s237
        %v239 = vadd.f32 %v236, %v238
        %s240 = scalar_lea.vmem %s213, 2 [#allocation9]
        %241 = vst.msk [vmem:[%s240] ss:$4 sm:$0x3] %vm224, %v239
        %s242 = sld [smem:[#allocation6 + $0x3]]
        %v243 = vstv %s242
        %v244 = vmul.f32 %v214, %v243
        %s245 = sld [smem:[#allocation7 + $0x3]]
        %v246 = vstv %s245
        %v247 = vadd.f32 %v244, %v246
        %s248 = scalar_lea.vmem %s213, 3 [#allocation9]
        %249 = vst.msk [vmem:[%s248] ss:$4 sm:$0x3] %vm224, %v247
        %s250 = sand.u32 %s98, 1
        %s251 = scalar_lea.sflag [#allocation4], %s250
        %s252 = sand.u32 %s98, 1
        %s253 = smul.addr %s252, 8
        %s254 = scalar_lea.vmem [#allocation9], %s253
        // Predicated region
        $region45: #{tpu_custom_call.1} parent=31 // pred_check
          %p255 = pneg %p108
        $region46: #{tpu_custom_call.1} parent=31 // pred_check_branch
          %257 = sbr.rel (%p255) target = $region48
        $region47: #{tpu_custom_call.1} parent=31 // pred_region
          %s259 = ssub.s32 128, 128
          %260 = vsyncadd %s251, %s259
          %s261 = smul.addr %s22, 2
          %s262 = smul.addr %s261, 64
          %s263 = scalar_lea.hbm %s3, %s262
          %s265 = sshll.u32 %s254, 4
          %s266 = int_to_ptr.vmem [resolvable:$true] %s265
          %268 = dma.vmem_to_hbm [thread:$0]  %s266, 128, %s263, %s251
        $region48: #{tpu_custom_call.1} parent=31 // pred_fallthru
          _
      $region32: #{tpu_custom_call.1} parent=5 // pred_fallthru
        _
      %p269 = scmp.le.s32.totalorder 2, %s17
      // Predicated region
      $region49: #{tpu_custom_call.1} parent=5 // pred_check
        %p270 = pneg %p269
      $region50: #{tpu_custom_call.1} parent=5 // pred_check_branch
        %272 = sbr.rel (%p270) target = $region52
      $region51: #{tpu_custom_call.1} parent=5 // pred_region
        %s273 = ssub.s32 %s17, 2
        // Predicated region
        $region53: #{tpu_custom_call.1} parent=51 // pred_check
          %p274 = pneg %p114
        $region54: #{tpu_custom_call.1} parent=51 // pred_check_branch
          %276 = sbr.rel (%p274) target = $region56
        $region55: #{tpu_custom_call.1} parent=51 // pred_region
          %s277 = sand.u32 %s99, 1
          %s278 = scalar_lea.sflag [#allocation4], %s277
          %s279 = sand.u32 %s99, 1
          %s280 = smul.addr %s279, 8
          %s281 = scalar_lea.vmem [#allocation9], %s280
          %282 = dma.done %s278, 128
        $region56: #{tpu_custom_call.1} parent=51 // pred_fallthru
          _
      $region52: #{tpu_custom_call.1} parent=5 // pred_fallthru
        _
    $region6: #{tpu_custom_call.1} parent=1 // loop_footer
      %s21 = sadd.s32 1, %s17
    $region7: #{tpu_custom_call.1} parent=1 // loop_footer_branch
      %16 = sbr.rel target = $region3
    $region8: #{tpu_custom_call.1} parent=1 // loop_exit
      _
    %283 = vsyncpa [#allocation3], 1
    %s284 = scalar_lea.sflag [#allocation3], 1
    %285 = vsyncpa %s284, 1
    %286 = vsyncpa [#allocation4], 1
    %s287 = scalar_lea.sflag [#allocation4], 1
    %288 = vsyncpa %s287, 1
    %289 = vsyncpa [#allocation5], 1
    %s290 = scalar_lea.sflag [#allocation5], 1
    %291 = vsyncpa %s290, 1
    %292 = vsyncpa [#allocation8], 1

</llo_original>
